<compile_context>
chip_gen: v5e
topology: v5e:2x2
jax: 0.10.0
libtpu: 0.0.40
codegen_flags: <defaults>
</compile_context>

<pallas_src>
import jax
import jax.numpy as jnp
from jax.experimental import pallas as pl
from jax.experimental.pallas import tpu as pltpu


_GATHER_BUFS = 8  # ring depth (power of two) for in-flight gather DMAs


def _masklm_kernel(rows_ref,                         # scalar prefetch (SMEM): (M_pad,) int32
                   x_hbm,                            # (batch*seq, E) left in HBM (pl.ANY)
                   w1_ref, b1_ref, g_ref, beta_ref,  # whole-array VMEM blocks (small)
                   w2_ref, b2_ref,                   # streamed vocab tiles
                   o_ref,                            # (TM, TV) output tile
                   x_buf, h_buf, dma_sem):           # VMEM scratch + DMA semaphore ring
    i = pl.program_id(0)   # M tile
    j = pl.program_id(1)   # vocab tile
    tm = x_buf.shape[0]

    @pl.when(j == 0)
    def _compute_hidden():
        # --- fused gather: DMA this M tile's rows HBM -> VMEM with a ring of
        #     _GATHER_BUFS in-flight copies (overlapped, bounded semaphore use) ---
        @pl.loop(0, tm)
        def _start(r):
            @pl.when(r >= _GATHER_BUFS)
            def _():
                # release the semaphore slot we are about to reuse
                pltpu.make_async_copy(
                    x_hbm.at[pl.ds(0, 1), :],
                    x_buf.at[pl.ds(r - _GATHER_BUFS, 1), :],
                    dma_sem.at[r & (_GATHER_BUFS - 1)]).wait()
            row = rows_ref[i * tm + r]
            pltpu.make_async_copy(
                x_hbm.at[pl.ds(row, 1), :],
                x_buf.at[pl.ds(r, 1), :],
                dma_sem.at[r & (_GATHER_BUFS - 1)]).start()

        tail = min(tm, _GATHER_BUFS)

        @pl.loop(tm - tail, tm)
        def _drain(r):
            pltpu.make_async_copy(
                x_hbm.at[pl.ds(0, 1), :],
                x_buf.at[pl.ds(r, 1), :],
                dma_sem.at[r & (_GATHER_BUFS - 1)]).wait()

        # --- fc1 (MXU, f32 accumulate) + ReLU ---
        h = jnp.dot(x_buf[...], w1_ref[...], preferred_element_type=jnp.float32)
        h = jnp.maximum(h + b1_ref[...].astype(jnp.float32), 0.0)

        # --- LayerNorm over the full hidden dim (eps=1e-5, torch default), f32 stats ---
        mean = jnp.mean(h, axis=-1, keepdims=True)
        var = jnp.mean((h - mean) * (h - mean), axis=-1, keepdims=True)
        hn = (h - mean) * jax.lax.rsqrt(var + 1e-5)
        hn = hn * g_ref[...].astype(jnp.float32) + beta_ref[...].astype(jnp.float32)
        h_buf[...] = hn.astype(h_buf.dtype)

    # --- fc2 on this vocab tile (w2 tile is BlockSpec double-buffered from HBM) ---
    out = jnp.dot(h_buf[...], w2_ref[...], preferred_element_type=jnp.float32)
    o_ref[...] = (out + b2_ref[...].astype(jnp.float32)).astype(o_ref.dtype)


def _round_up(v, m):
    return (v + m - 1) // m * m


def masklm_forward(x, pred_position, params, *, tm_max=128, tv_max=2048):
    """
    x:             (batch, seq_len, embedding_dim)
    pred_position: (batch, position_len) int32
    returns:       (batch, position_len, vocab_size)
    """
    batch, seq_len, emb = x.shape
    num_pos = pred_position.shape[1]
    w1, b1 = params["w1"], params["b1"]
    gamma, beta = params["gamma"], params["beta"]
    w2, b2 = params["w2"], params["b2"]
    hidden = w1.shape[1]
    vocab = w2.shape[1]

    # ---- flattened, clamped gather row indices (scalar prefetch; Pallas DMAs are
    #      not bounds-checked, so clamp explicitly) --------------------------------
    M = batch * num_pos
    pos = jnp.clip(pred_position, 0, seq_len - 1).astype(jnp.int32)
    rows = (jnp.arange(batch, dtype=jnp.int32)[:, None] * seq_len + pos).reshape(-1)

    # ---- tile / padding choices (lane-dense, VMEM-budgeted) ----------------------
    m_pad = _round_up(M, 8)
    tm = m_pad if m_pad <= tm_max else tm_max
    m_pad = _round_up(m_pad, tm)

    tv = tv_max
    vmem_budget = 24 * 1024 * 1024   # double-buffered w2 + out tiles; v7x (64 MiB) safe
    while tv > 128 and 2 * tv * (hidden * w2.dtype.itemsize + tm * x.dtype.itemsize) > vmem_budget:
        tv //= 2
    tv = min(tv, _round_up(vocab, 128))
    v_pad = _round_up(vocab, tv)

    rows = jnp.pad(rows, (0, m_pad - M))                        # padded rows hit row 0 (valid)
    w2_p = jnp.pad(w2, ((0, 0), (0, v_pad - vocab)))
    b2_p = jnp.pad(b2, (0, v_pad - vocab)).reshape(1, v_pad)
    x_flat = x.reshape(batch * seq_len, emb)

    grid = (m_pad // tm, v_pad // tv)

    # scoped-VMEM limit: 2x estimated footprint, capped so it is v7x-safe.
    est = (2 * tv * (hidden * w2.dtype.itemsize + tm * x.dtype.itemsize + 4)
           + emb * hidden * w1.dtype.itemsize + 3 * hidden * 4
           + tm * (emb + hidden) * 4)
    vmem_limit = int(min(60 * 1024 * 1024, max(32 * 1024 * 1024, 2 * est)))

    cost = pl.CostEstimate(
        flops=int(2 * m_pad * hidden * (emb + v_pad) + 8 * m_pad * hidden),
        transcendentals=int(m_pad),
        bytes_accessed=int(x_flat.size * x_flat.dtype.itemsize
                           + w1.size * w1.dtype.itemsize
                           + w2_p.size * w2_p.dtype.itemsize
                           + m_pad * v_pad * x.dtype.itemsize))

    out_pad = pl.pallas_call(
        _masklm_kernel,
        out_shape=jax.ShapeDtypeStruct((m_pad, v_pad), x.dtype),
        grid_spec=pltpu.PrefetchScalarGridSpec(
            num_scalar_prefetch=1,
            grid=grid,
            in_specs=[
                pl.BlockSpec(memory_space=pl.ANY),                      # x_flat: stays in HBM
                pl.BlockSpec((emb, hidden), lambda i, j, *_: (0, 0)),   # w1
                pl.BlockSpec((1, hidden), lambda i, j, *_: (0, 0)),     # b1
                pl.BlockSpec((1, hidden), lambda i, j, *_: (0, 0)),     # gamma
                pl.BlockSpec((1, hidden), lambda i, j, *_: (0, 0)),     # beta
                pl.BlockSpec((hidden, tv), lambda i, j, *_: (0, j)),    # w2 (streamed tiles)
                pl.BlockSpec((1, tv), lambda i, j, *_: (0, j)),         # b2
            ],
            out_specs=pl.BlockSpec((tm, tv), lambda i, j, *_: (i, j)),
            scratch_shapes=[
                pltpu.VMEM((tm, emb), x.dtype),           # gathered rows
                pltpu.VMEM((tm, hidden), w2.dtype),       # normalized hidden (reused across j)
                pltpu.SemaphoreType.DMA((_GATHER_BUFS,)),  # gather DMA ring
            ]),
        compiler_params=pltpu.CompilerParams(
            # vocab axis reuses the per-M-tile hidden scratch computed at j == 0,
            # so it must be "arbitrary"; M axis shards across v7x's two TensorCores.
            dimension_semantics=("parallel", "arbitrary"),
            vmem_limit_bytes=vmem_limit),
        cost_estimate=cost,
    )(rows, x_flat, w1, b1.reshape(1, hidden), gamma.reshape(1, hidden),
      beta.reshape(1, hidden), w2_p, b2_p)

    return out_pad[:M, :vocab].reshape(batch, num_pos, vocab)


def _reference_forward(x, pred_position, params):
    batch, seq_len, _ = x.shape
    num_pos = pred_position.shape[1]
    flat_pos = pred_position.reshape(-1)
    batch_idx = jnp.repeat(jnp.arange(batch), num_pos)
    mx = x[batch_idx, flat_pos]
    h = mx @ params["w1"] + params["b1"]
    h = jnp.maximum(h, 0.0)
    mean = jnp.mean(h, axis=-1, keepdims=True)
    var = jnp.mean((h - mean) ** 2, axis=-1, keepdims=True)
    hn = (h - mean) / jnp.sqrt(var + 1e-5) * params["gamma"] + params["beta"]
    out = hn @ params["w2"] + params["b2"]
    return out.reshape(batch, num_pos, -1)


if __name__ == "__main__":
    # Small shapes consistent with the module's forward.  Chosen so the kernel
    # exercises multiple M tiles AND multiple vocab tiles (tm_max=8, tv_max=128).
    batch, seq_len = 2, 16
    embedding_dim, mlm_hidden, vocab_size = 32, 64, 384
    position_len = 12

    key = jax.random.PRNGKey(0)
    kx, kp, k1, k2, k3, k4 = jax.random.split(key, 6)

    x = jax.random.normal(kx, (batch, seq_len, embedding_dim), dtype=jnp.float32)
    pred_position = jax.random.randint(kp, (batch, position_len), 0, seq_len, dtype=jnp.int32)

    # Deterministic synthetic parameters (shapes from the module's __init__).
    params = {
        "w1": jax.random.normal(k1, (embedding_dim, mlm_hidden), dtype=jnp.float32) * 0.05,
        "b1": jax.random.normal(k2, (mlm_hidden,), dtype=jnp.float32) * 0.01,
        "gamma": jnp.ones((mlm_hidden,), dtype=jnp.float32),
        "beta": jnp.zeros((mlm_hidden,), dtype=jnp.float32),
        "w2": jax.random.normal(k3, (mlm_hidden, vocab_size), dtype=jnp.float32) * 0.05,
        "b2": jax.random.normal(k4, (vocab_size,), dtype=jnp.float32) * 0.01,
    }

    out = masklm_forward(x, pred_position, params, tm_max=8, tv_max=128)
    out = jax.block_until_ready(out)

    ref = _reference_forward(x, pred_position, params)
    assert out.shape == (batch, position_len, vocab_size)
    assert jnp.allclose(out, ref, atol=2e-4, rtol=2e-4)

    print("KERNEL_OK")
</pallas_src>

<mosaic_0001>
module attributes {stable_mosaic.version = 11 : i64} {
  func.func @_masklm_kernel(%arg0: i32, %arg1: i32, %arg2: memref<24xi32, #tpu.memory_space<smem>>, %arg3: memref<32x32xf32, #tpu.memory_space<any>>, %arg4: memref<32x64xf32, #tpu.memory_space<vmem>>, %arg5: memref<1x64xf32, #tpu.memory_space<vmem>>, %arg6: memref<1x64xf32, #tpu.memory_space<vmem>>, %arg7: memref<1x64xf32, #tpu.memory_space<vmem>>, %arg8: memref<64x128xf32, #tpu.memory_space<vmem>>, %arg9: memref<1x128xf32, #tpu.memory_space<vmem>>, %arg10: memref<8x128xf32, #tpu.memory_space<vmem>>, %arg11: memref<8x32xf32, #tpu.memory_space<vmem>>, %arg12: memref<8x64xf32, #tpu.memory_space<vmem>>, %arg13: memref<8x!tpu.dma_semaphore, #tpu.memory_space<semaphore_mem>>) attributes {dimension_semantics = [#tpu.dimension_semantics<parallel>, #tpu.dimension_semantics<arbitrary>], iteration_bounds = array<i64: 3, 3>, scalar_prefetch = 1 : i64, scratch_operands = 3 : i64, tpu.core_type = #tpu.core_type<tc>, window_params = [{}, {pipeline_mode = #tpu.pipeline_mode<synchronous>, transform_indices = @transform_1, window_bounds = array<i64: 32, 64>}, {pipeline_mode = #tpu.pipeline_mode<synchronous>, transform_indices = @transform_2, window_bounds = array<i64: 1, 64>}, {pipeline_mode = #tpu.pipeline_mode<synchronous>, transform_indices = @transform_3, window_bounds = array<i64: 1, 64>}, {pipeline_mode = #tpu.pipeline_mode<synchronous>, transform_indices = @transform_4, window_bounds = array<i64: 1, 64>}, {transform_indices = @transform_5, window_bounds = array<i64: 64, 128>}, {transform_indices = @transform_6, window_bounds = array<i64: 1, 128>}, {transform_indices = @transform_7, window_bounds = array<i64: 8, 128>}]} {
    %c0_i32 = arith.constant 0 : i32
    %0 = arith.cmpi eq, %arg1, %c0_i32 : i32
    %1 = arith.extui %0 : i1 to i32
    %c0_i32_0 = arith.constant 0 : i32
    %2 = arith.cmpi ne, %1, %c0_i32_0 : i32
    scf.if %2 {
      %c0_i32_8 = arith.constant 0 : i32
      %c8_i32 = arith.constant 8 : i32
      %10 = arith.addi %c0_i32_8, %c8_i32 : i32
      %c1_i32 = arith.constant 1 : i32
      scf.for %arg14 = %c0_i32_8 to %10 step %c1_i32  : i32 {
        %c1_i32_33 = arith.constant 1 : i32
        %47 = arith.muli %arg14, %c1_i32_33 : i32
        %c0_i32_34 = arith.constant 0 : i32
        %48 = arith.addi %c0_i32_34, %47 : i32
        %c8_i32_35 = arith.constant 8 : i32
        %49 = arith.cmpi sge, %48, %c8_i32_35 : i32
        %50 = arith.extui %49 : i1 to i32
        %c0_i32_36 = arith.constant 0 : i32
        %51 = arith.cmpi ne, %50, %c0_i32_36 : i32
        scf.if %51 {
          %c8_i32_40 = arith.constant 8 : i32
          %61 = arith.subi %48, %c8_i32_40 : i32
          %c7_i32_41 = arith.constant 7 : i32
          %62 = arith.andi %48, %c7_i32_41 : i32
          %c0_i32_42 = arith.constant 0 : i32
          %c0_i32_43 = arith.constant 0 : i32
          %63 = tpu.memref_slice %arg3[%c0_i32_42, %c0_i32_43] : memref<32x32xf32, #tpu.memory_space<any>> -> memref<1x32xf32, #tpu.memory_space<any>>
          %c0_i32_44 = arith.constant 0 : i32
          %64 = tpu.memref_slice %arg11[%61, %c0_i32_44] : memref<8x32xf32, #tpu.memory_space<vmem>> -> memref<1x32xf32, #tpu.memory_space<vmem>>
          %65 = tpu.memref_slice %arg13[%62] : memref<8x!tpu.dma_semaphore, #tpu.memory_space<semaphore_mem>> -> memref<1x!tpu.dma_semaphore, #tpu.memory_space<semaphore_mem>>
          %66 = tpu.memref_squeeze %65 : memref<1x!tpu.dma_semaphore, #tpu.memory_space<semaphore_mem>> -> memref<!tpu.dma_semaphore, #tpu.memory_space<semaphore_mem>>
          tpu.wait_dma2 semaphore(%66 : memref<!tpu.dma_semaphore, #tpu.memory_space<semaphore_mem>>) src(%63 : memref<1x32xf32, #tpu.memory_space<any>>) dst(%64 : memref<1x32xf32, #tpu.memory_space<vmem>>)
        } else {
        }
        %c8_i32_37 = arith.constant 8 : i32
        %52 = arith.muli %arg0, %c8_i32_37 : i32
        %53 = arith.addi %52, %48 : i32
        %54 = arith.index_cast %53 : i32 to index
        %55 = memref.load %arg2[%54] : memref<24xi32, #tpu.memory_space<smem>>
        %c7_i32 = arith.constant 7 : i32
        %56 = arith.andi %48, %c7_i32 : i32
        %c0_i32_38 = arith.constant 0 : i32
        %57 = tpu.memref_slice %arg3[%55, %c0_i32_38] : memref<32x32xf32, #tpu.memory_space<any>> -> memref<1x32xf32, #tpu.memory_space<any>>
        %c0_i32_39 = arith.constant 0 : i32
        %58 = tpu.memref_slice %arg11[%48, %c0_i32_39] : memref<8x32xf32, #tpu.memory_space<vmem>> -> memref<1x32xf32, #tpu.memory_space<vmem>>
        %59 = tpu.memref_slice %arg13[%56] : memref<8x!tpu.dma_semaphore, #tpu.memory_space<semaphore_mem>> -> memref<1x!tpu.dma_semaphore, #tpu.memory_space<semaphore_mem>>
        %60 = tpu.memref_squeeze %59 : memref<1x!tpu.dma_semaphore, #tpu.memory_space<semaphore_mem>> -> memref<!tpu.dma_semaphore, #tpu.memory_space<semaphore_mem>>
        tpu.enqueue_dma source(%57 : memref<1x32xf32, #tpu.memory_space<any>>) target(%58 : memref<1x32xf32, #tpu.memory_space<vmem>>) target_semaphore(%60 : memref<!tpu.dma_semaphore, #tpu.memory_space<semaphore_mem>>)
      }
      %c8_i32_9 = arith.constant 8 : i32
      %c0_i32_10 = arith.constant 0 : i32
      %c8_i32_11 = arith.constant 8 : i32
      %11 = arith.addi %c0_i32_10, %c8_i32_11 : i32
      %c1_i32_12 = arith.constant 1 : i32
      scf.for %arg14 = %c0_i32_10 to %11 step %c1_i32_12  : i32 {
        %c1_i32_33 = arith.constant 1 : i32
        %47 = arith.muli %arg14, %c1_i32_33 : i32
        %c0_i32_34 = arith.constant 0 : i32
        %48 = arith.addi %c0_i32_34, %47 : i32
        %c7_i32 = arith.constant 7 : i32
        %49 = arith.andi %48, %c7_i32 : i32
        %c0_i32_35 = arith.constant 0 : i32
        %c0_i32_36 = arith.constant 0 : i32
        %50 = tpu.memref_slice %arg3[%c0_i32_35, %c0_i32_36] : memref<32x32xf32, #tpu.memory_space<any>> -> memref<1x32xf32, #tpu.memory_space<any>>
        %c0_i32_37 = arith.constant 0 : i32
        %51 = tpu.memref_slice %arg11[%48, %c0_i32_37] : memref<8x32xf32, #tpu.memory_space<vmem>> -> memref<1x32xf32, #tpu.memory_space<vmem>>
        %52 = tpu.memref_slice %arg13[%49] : memref<8x!tpu.dma_semaphore, #tpu.memory_space<semaphore_mem>> -> memref<1x!tpu.dma_semaphore, #tpu.memory_space<semaphore_mem>>
        %53 = tpu.memref_squeeze %52 : memref<1x!tpu.dma_semaphore, #tpu.memory_space<semaphore_mem>> -> memref<!tpu.dma_semaphore, #tpu.memory_space<semaphore_mem>>
        tpu.wait_dma2 semaphore(%53 : memref<!tpu.dma_semaphore, #tpu.memory_space<semaphore_mem>>) src(%50 : memref<1x32xf32, #tpu.memory_space<any>>) dst(%51 : memref<1x32xf32, #tpu.memory_space<vmem>>)
      }
      %c8_i32_13 = arith.constant 8 : i32
      %c0_14 = arith.constant 0 : index
      %c0_15 = arith.constant 0 : index
      %12 = vector.load %arg11[%c0_14, %c0_15] : memref<8x32xf32, #tpu.memory_space<vmem>>, vector<8x32xf32>
      %c0_16 = arith.constant 0 : index
      %c0_17 = arith.constant 0 : index
      %13 = vector.load %arg4[%c0_16, %c0_17] : memref<32x64xf32, #tpu.memory_space<vmem>>, vector<32x64xf32>
      %cst_18 = arith.constant dense<0.000000e+00> : vector<8x64xf32>
      %14 = tpu.matmul %12, %13, %cst_18 {dimension_numbers = #tpu.dot_dimension_numbers<[1], [0], [0], [1], [0, 0, 1, 1], [], []>} : vector<8x32xf32>, vector<32x64xf32>, vector<8x64xf32> -> vector<8x64xf32>
      %c0_19 = arith.constant 0 : index
      %c0_20 = arith.constant 0 : index
      %15 = vector.load %arg5[%c0_19, %c0_20] : memref<1x64xf32, #tpu.memory_space<vmem>>, vector<1x64xf32>
      %16 = vector.broadcast %15 : vector<1x64xf32> to vector<8x64xf32>
      %17 = arith.addf %14, %16 : vector<8x64xf32>
      %cst_21 = arith.constant 0.000000e+00 : f32
      %18 = vector.broadcast %cst_21 : f32 to vector<8x64xf32>
      %19 = arith.maximumf %17, %18 : vector<8x64xf32>
      %cst_22 = arith.constant dense<0.000000e+00> : vector<8xf32>
      %20 = vector.multi_reduction <add>, %19, %cst_22 [1] : vector<8x64xf32> to vector<8xf32>
      %21 = vector.shape_cast %20 : vector<8xf32> to vector<8x1xf32>
      %cst_23 = arith.constant 6.400000e+01 : f32
      %22 = vector.broadcast %cst_23 : f32 to vector<8x1xf32>
      %23 = arith.divf %21, %22 : vector<8x1xf32>
      %24 = vector.broadcast %23 : vector<8x1xf32> to vector<8x64xf32>
      %25 = arith.subf %19, %24 : vector<8x64xf32>
      %26 = vector.broadcast %23 : vector<8x1xf32> to vector<8x64xf32>
      %27 = arith.subf %19, %26 : vector<8x64xf32>
      %28 = arith.mulf %25, %27 : vector<8x64xf32>
      %cst_24 = arith.constant dense<0.000000e+00> : vector<8xf32>
      %29 = vector.multi_reduction <add>, %28, %cst_24 [1] : vector<8x64xf32> to vector<8xf32>
      %30 = vector.shape_cast %29 : vector<8xf32> to vector<8x1xf32>
      %cst_25 = arith.constant 6.400000e+01 : f32
      %31 = vector.broadcast %cst_25 : f32 to vector<8x1xf32>
      %32 = arith.divf %30, %31 : vector<8x1xf32>
      %33 = vector.broadcast %23 : vector<8x1xf32> to vector<8x64xf32>
      %34 = arith.subf %19, %33 : vector<8x64xf32>
      %cst_26 = arith.constant 9.99999974E-6 : f32
      %35 = vector.broadcast %cst_26 : f32 to vector<8x1xf32>
      %36 = arith.addf %32, %35 : vector<8x1xf32>
      %37 = math.rsqrt %36 : vector<8x1xf32>
      %38 = vector.broadcast %37 : vector<8x1xf32> to vector<8x64xf32>
      %39 = arith.mulf %34, %38 : vector<8x64xf32>
      %c0_27 = arith.constant 0 : index
      %c0_28 = arith.constant 0 : index
      %40 = vector.load %arg6[%c0_27, %c0_28] : memref<1x64xf32, #tpu.memory_space<vmem>>, vector<1x64xf32>
      %41 = vector.broadcast %40 : vector<1x64xf32> to vector<8x64xf32>
      %42 = arith.mulf %39, %41 : vector<8x64xf32>
      %c0_29 = arith.constant 0 : index
      %c0_30 = arith.constant 0 : index
      %43 = vector.load %arg7[%c0_29, %c0_30] : memref<1x64xf32, #tpu.memory_space<vmem>>, vector<1x64xf32>
      %44 = vector.broadcast %43 : vector<1x64xf32> to vector<8x64xf32>
      %45 = arith.addf %42, %44 : vector<8x64xf32>
      %c0_31 = arith.constant 0 : index
      %c0_32 = arith.constant 0 : index
      %46 = vector.load %arg12[%c0_31, %c0_32] : memref<8x64xf32, #tpu.memory_space<vmem>>, vector<8x64xf32>
      tpu.vector_store %arg12[%c0_31, %c0_32], %45 {strides = array<i32>} : memref<8x64xf32, #tpu.memory_space<vmem>>, vector<8x64xf32>,
    } else {
    }
    %c0 = arith.constant 0 : index
    %c0_1 = arith.constant 0 : index
    %3 = vector.load %arg12[%c0, %c0_1] : memref<8x64xf32, #tpu.memory_space<vmem>>, vector<8x64xf32>
    %c0_2 = arith.constant 0 : index
    %c0_3 = arith.constant 0 : index
    %4 = vector.load %arg8[%c0_2, %c0_3] : memref<64x128xf32, #tpu.memory_space<vmem>>, vector<64x128xf32>
    %cst = arith.constant dense<0.000000e+00> : vector<8x128xf32>
    %5 = tpu.matmul %3, %4, %cst {dimension_numbers = #tpu.dot_dimension_numbers<[1], [0], [0], [1], [0, 0, 1, 1], [], []>} : vector<8x64xf32>, vector<64x128xf32>, vector<8x128xf32> -> vector<8x128xf32>
    %c0_4 = arith.constant 0 : index
    %c0_5 = arith.constant 0 : index
    %6 = vector.load %arg9[%c0_4, %c0_5] : memref<1x128xf32, #tpu.memory_space<vmem>>, vector<1x128xf32>
    %7 = vector.broadcast %6 : vector<1x128xf32> to vector<8x128xf32>
    %8 = arith.addf %5, %7 : vector<8x128xf32>
    %c0_6 = arith.constant 0 : index
    %c0_7 = arith.constant 0 : index
    %9 = vector.load %arg10[%c0_6, %c0_7] : memref<8x128xf32, #tpu.memory_space<vmem>>, vector<8x128xf32>
    tpu.vector_store %arg10[%c0_6, %c0_7], %8 {strides = array<i32>} : memref<8x128xf32, #tpu.memory_space<vmem>>, vector<8x128xf32>,
    return
  }
  func.func @transform_1(%arg0: i32, %arg1: i32, %arg2: memref<24xi32, #tpu.memory_space<smem>>) -> (i32, i32) {
    %c0_i32 = arith.constant 0 : i32
    %c0_i32_0 = arith.constant 0 : i32
    %c0_i32_1 = arith.constant 0 : i32
    return %c0_i32, %c0_i32_0 : i32, i32
  }
  func.func @transform_2(%arg0: i32, %arg1: i32, %arg2: memref<24xi32, #tpu.memory_space<smem>>) -> (i32, i32) {
    %c0_i32 = arith.constant 0 : i32
    %c0_i32_0 = arith.constant 0 : i32
    %c0_i32_1 = arith.constant 0 : i32
    return %c0_i32, %c0_i32_0 : i32, i32
  }
  func.func @transform_3(%arg0: i32, %arg1: i32, %arg2: memref<24xi32, #tpu.memory_space<smem>>) -> (i32, i32) {
    %c0_i32 = arith.constant 0 : i32
    %c0_i32_0 = arith.constant 0 : i32
    %c0_i32_1 = arith.constant 0 : i32
    return %c0_i32, %c0_i32_0 : i32, i32
  }
  func.func @transform_4(%arg0: i32, %arg1: i32, %arg2: memref<24xi32, #tpu.memory_space<smem>>) -> (i32, i32) {
    %c0_i32 = arith.constant 0 : i32
    %c0_i32_0 = arith.constant 0 : i32
    %c0_i32_1 = arith.constant 0 : i32
    return %c0_i32, %c0_i32_0 : i32, i32
  }
  func.func @transform_5(%arg0: i32, %arg1: i32, %arg2: memref<24xi32, #tpu.memory_space<smem>>) -> (i32, i32) {
    %c0_i32 = arith.constant 0 : i32
    %c0_i32_0 = arith.constant 0 : i32
    return %c0_i32, %arg1 : i32, i32
  }
  func.func @transform_6(%arg0: i32, %arg1: i32, %arg2: memref<24xi32, #tpu.memory_space<smem>>) -> (i32, i32) {
    %c0_i32 = arith.constant 0 : i32
    %c0_i32_0 = arith.constant 0 : i32
    return %c0_i32, %arg1 : i32, i32
  }
  func.func @transform_7(%arg0: i32, %arg1: i32, %arg2: memref<24xi32, #tpu.memory_space<smem>>) -> (i32, i32) {
    %c0_i32 = arith.constant 0 : i32
    return %arg0, %arg1 : i32, i32
  }
}

</mosaic_0001>

<llo_original>
// kernel: tpu_custom_call.1
$region0: #{tpu_custom_call.1}
  #allocation0 [shape = 'u32[]', space=smem, size = 0x4, offset = 0x4, fixed_abs, tag = 'smem constant byte address 0x4 - core index']
  #allocation1 [shape = 'u32[72,128]{1,0:T(1,128)}', space=vmem, size = 0x9000, scoped, tag = 'internal scratch']
  #allocation2 [shape = 'f32[8,32]{1,0:T(8,128)}', space=vmem, size = 0x1000, scoped, tag = 'scratch operand']
  #allocation3 [shape = 'f32[8,64]{1,0:T(8,128)}', space=vmem, size = 0x1000, scoped, tag = 'scratch operand']
  #allocation4 [shape = 's32[8]{0}', space=sflag, size = 0x20, scoped, tag = 'scratch operand']
  #allocation5 [shape = 's32[1]{0}', space=sflag, size = 0x4, scoped, tag = 'scoped memory for tpu_custom_call.1']
  #allocation6 [shape = 'u8[512]{0}', space=smem, size = 0x200, scoped, tag = 'prefetched SMEM operand 0']
  #allocation14 [shape = 's32[]', space=sflag, size = 0x4, offset = 0, fixed_abs, tag = 'sflag constant byte address 0x0 - dummy sync flag']
  #allocation15 [shape = 's32[]', space=sflag, size = 0x4, offset = 0, fixed_abs, tag = 'sflag constant byte address 0x0 - dummy sync flag']
  #allocation16 [shape = 'u32[]', space=smem, size = 0x4, offset = 0x44, fixed_abs, tag = 'smem constant byte address 0x44 - assertion arg 0']
  #allocation17 [shape = 'u32[]', space=smem, size = 0x4, offset = 0x48, fixed_abs, tag = 'smem constant byte address 0x48 - assertion arg 1']
  %s0 = inlined_call_operand.hbm [shape: s32[24], index: 0, kind: input, shape index: {}]
  %s1 = inlined_call_operand.hbm [shape: f32[32,32], index: 1, kind: input, shape index: {}]
  %s2 = inlined_call_operand.hbm [shape: f32[32,64], index: 2, kind: input, shape index: {}]
  %s3 = inlined_call_operand.vmem [shape: f32[1,64], index: 3, kind: input, shape index: {}]
  %s4 = inlined_call_operand.vmem [shape: f32[1,64], index: 4, kind: input, shape index: {}]
  %s5 = inlined_call_operand.hbm [shape: f32[1,64], index: 5, kind: input, shape index: {}]
  %s6 = inlined_call_operand.hbm [shape: f32[64,384], index: 6, kind: input, shape index: {}]
  %s7 = inlined_call_operand.vmem [shape: f32[1,384], index: 7, kind: input, shape index: {}]
  %s8 = inlined_call_operand.hbm [shape: f32[24,384], index: 8, kind: output, shape index: {}]
  %s9 = sld [smem:[#allocation0]]
  $region95: #{tpu_custom_call.1} parent=0
    _
  %s11 = ssub.s32 1, %s9
  %s12 = scalar_select 0, %s11, %s9
  %s14 = sshll.u32 %s0, 4
  %s15 = int_to_ptr.hbm [resolvable:$true] %s14
  %17 = dma.hbm_to_smem %s15, 16, [#allocation6], [#allocation5]
  %19 = dma.done [#allocation5], 16
  %20 = sfence
  $region1: #{tpu_custom_call.1} parent=0
    #allocation7 [shape = 'u8[16384]{0}', space=vmem, size = 0x4000, scoped, tag = 'input window, operand 2, single buffered']
    #allocation8 [shape = 's32[2]{0}', space=sflag, size = 0x8, scoped, tag = 'scoped memory for tpu_custom_call.1']
    #allocation9 [shape = 's32[2]{0}', space=sflag, size = 0x8, scoped, tag = 'scoped memory for tpu_custom_call.1']
    #allocation10 [shape = 'u8[512]{0}', space=vmem, size = 0x400, scoped, tag = 'input window, operand 5, single buffered']
    #allocation11 [shape = 's32[1]{0}', space=sflag, size = 0x4, scoped, tag = 'scoped memory for tpu_custom_call.1']
    #allocation12 [shape = 'u8[65536]{0}', space=vmem, size = 0x10000, scoped, tag = 'input window, operand 6']
    #allocation13 [shape = 'u8[8192]{0}', space=vmem, size = 0x2000, scoped, tag = 'output window, operand 0']
    %21 = vsyncpa [#allocation8], 0
    %22 = vsyncpa [#allocation11], 0
    %23 = vsyncpa [#allocation9], 0
    %s24 = scalar_lea.sflag [#allocation9], 1
    %25 = vsyncpa %s24, 0
    loop: start=0, step=1, limit=11
    $region2: #{tpu_custom_call.1} parent=1 // loop_pre_header
      _
    $region3: #{tpu_custom_call.1} parent=1 // loop_header
      %s27 = sphi 0, %s31
      %p28 = scmp.ge.s32.totalorder %s27, 11
      %s34 = sphi 0, %s46
      %s35 = sphi 0, %s42
      %s36 = sphi 0, %s34
      %s37 = sphi 0, %s35
      %s38 = sphi 0, %s36
      %s39 = sphi 0, %s37
      %s47 = sphi 0, %s47
      %s49 = sphi 0, %s47
      %s50 = sphi 0, %s49
      %s64 = sphi 0, %s50
      %s68 = sphi 0, %s68
      %s70 = sphi 0, %s68
      %s71 = sphi 0, %s70
      %s85 = sphi 0, %s71
      %s89 = sphi 0, %s89
      %s91 = sphi 0, %s89
      %s92 = sphi 0, %s91
      %s106 = sphi 0, %s92
      %s110 = sphi 0, %s110
      %s112 = sphi 0, %s110
      %s113 = sphi 0, %s112
      %s127 = sphi 0, %s113
      %s133 = sphi 0, %s135
      %s136 = sphi 0, %s133
      %s137 = sphi 0, %s136
      %s153 = sphi 0, %s137
      %s159 = sphi 0, %s161
      %s162 = sphi 0, %s159
      %s163 = sphi 0, %s162
      %s179 = sphi 0, %s163
      %s187 = sphi 0, %s189
      %s190 = sphi 0, %s187
      %s191 = sphi 0, %s190
      %s207 = sphi 0, %s191
    $region4: #{tpu_custom_call.1} parent=1 // loop_header_branch
      %30 = sbr.rel (%p28) target = $region8
    $region5: #{tpu_custom_call.1} parent=1 // loop_body
      %s32 = ssub.s32 %s27, 1
      %s33 = ssub.s32 %s27, 2
      %s40 = sadd.s32 1, %s35
      %p41 = scmp.ge.s32.totalorder %s40, 3
      %s42 = scalar_select %p41, 0, %s40
      %s43 = sadd.s32 1, %s34
      %s44 = scalar_select %p41, %s43, %s34
      %p45 = scmp.ge.s32.totalorder %s44, 3
      %s46 = scalar_select %p45, 0, %s44
      %s48 = sadd.s32 %s47, 1
      %p51 = scmp.eq.s32.totalorder %s27, 8
      %p52 = scmp.ne.s32.totalorder %s47, %s49
      %p53 = scmp.eq.s32.totalorder %s27, 0
      %p54 = por %p52, %p53
      %p55 = scmp.ne.s32.totalorder %s47, %s49
      %p56 = scmp.eq.s32.totalorder %s32, 8
      %p57 = por %p55, %p56
      %p58 = scmp.ne.s32.totalorder %s49, %s50
      %p59 = scmp.eq.s32.totalorder %s32, 0
      %p60 = por %p58, %p59
      %p61 = scmp.ne.s32.totalorder %s49, %s50
      %p62 = scmp.eq.s32.totalorder %s33, 8
      %p63 = por %p61, %p62
      %p65 = scmp.ne.s32.totalorder %s50, %s64
      %p66 = scmp.eq.s32.totalorder %s33, 0
      %p67 = por %p65, %p66
      %s69 = sadd.s32 %s68, 1
      %p72 = scmp.eq.s32.totalorder %s27, 8
      %p73 = scmp.ne.s32.totalorder %s68, %s70
      %p74 = scmp.eq.s32.totalorder %s27, 0
      %p75 = por %p73, %p74
      %p76 = scmp.ne.s32.totalorder %s68, %s70
      %p77 = scmp.eq.s32.totalorder %s32, 8
      %p78 = por %p76, %p77
      %p79 = scmp.ne.s32.totalorder %s70, %s71
      %p80 = scmp.eq.s32.totalorder %s32, 0
      %p81 = por %p79, %p80
      %p82 = scmp.ne.s32.totalorder %s70, %s71
      %p83 = scmp.eq.s32.totalorder %s33, 8
      %p84 = por %p82, %p83
      %p86 = scmp.ne.s32.totalorder %s71, %s85
      %p87 = scmp.eq.s32.totalorder %s33, 0
      %p88 = por %p86, %p87
      %s90 = sadd.s32 %s89, 1
      %p93 = scmp.eq.s32.totalorder %s27, 8
      %p94 = scmp.ne.s32.totalorder %s89, %s91
      %p95 = scmp.eq.s32.totalorder %s27, 0
      %p96 = por %p94, %p95
      %p97 = scmp.ne.s32.totalorder %s89, %s91
      %p98 = scmp.eq.s32.totalorder %s32, 8
      %p99 = por %p97, %p98
      %p100 = scmp.ne.s32.totalorder %s91, %s92
      %p101 = scmp.eq.s32.totalorder %s32, 0
      %p102 = por %p100, %p101
      %p103 = scmp.ne.s32.totalorder %s91, %s92
      %p104 = scmp.eq.s32.totalorder %s33, 8
      %p105 = por %p103, %p104
      %p107 = scmp.ne.s32.totalorder %s92, %s106
      %p108 = scmp.eq.s32.totalorder %s33, 0
      %p109 = por %p107, %p108
      %s111 = sadd.s32 %s110, 1
      %p114 = scmp.eq.s32.totalorder %s27, 8
      %p115 = scmp.ne.s32.totalorder %s110, %s112
      %p116 = scmp.eq.s32.totalorder %s27, 0
      %p117 = por %p115, %p116
      %p118 = scmp.ne.s32.totalorder %s110, %s112
      %p119 = scmp.eq.s32.totalorder %s32, 8
      %p120 = por %p118, %p119
      %p121 = scmp.ne.s32.totalorder %s112, %s113
      %p122 = scmp.eq.s32.totalorder %s32, 0
      %p123 = por %p121, %p122
      %p124 = scmp.ne.s32.totalorder %s112, %s113
      %p125 = scmp.eq.s32.totalorder %s33, 8
      %p126 = por %p124, %p125
      %p128 = scmp.ne.s32.totalorder %s113, %s127
      %p129 = scmp.eq.s32.totalorder %s33, 0
      %p130 = por %p128, %p129
      %s131 = ssub.s32 %s35, %s42
      %p132 = scmp.eq.s32.totalorder %s131, 0
      %s134 = sadd.s32 %s133, 1
      %s135 = scalar_select %p132, %s133, %s134
      %p138 = pneg %p132
      %p139 = scmp.eq.s32.totalorder %s27, 8
      %p140 = por %p138, %p139
      %p141 = scmp.ne.s32.totalorder %s133, %s136
      %p142 = scmp.eq.s32.totalorder %s27, 0
      %p143 = por %p141, %p142
      %p144 = scmp.ne.s32.totalorder %s133, %s136
      %p145 = scmp.eq.s32.totalorder %s32, 8
      %p146 = por %p144, %p145
      %p147 = scmp.ne.s32.totalorder %s136, %s137
      %p148 = scmp.eq.s32.totalorder %s32, 0
      %p149 = por %p147, %p148
      %p150 = scmp.ne.s32.totalorder %s136, %s137
      %p151 = scmp.eq.s32.totalorder %s33, 8
      %p152 = por %p150, %p151
      %p154 = scmp.ne.s32.totalorder %s137, %s153
      %p155 = scmp.eq.s32.totalorder %s33, 0
      %p156 = por %p154, %p155
      %s157 = ssub.s32 %s35, %s42
      %p158 = scmp.eq.s32.totalorder %s157, 0
      %s160 = sadd.s32 %s159, 1
      %s161 = scalar_select %p158, %s159, %s160
      %p164 = pneg %p158
      %p165 = scmp.eq.s32.totalorder %s27, 8
      %p166 = por %p164, %p165
      %p167 = scmp.ne.s32.totalorder %s159, %s162
      %p168 = scmp.eq.s32.totalorder %s27, 0
      %p169 = por %p167, %p168
      %p170 = scmp.ne.s32.totalorder %s159, %s162
      %p171 = scmp.eq.s32.totalorder %s32, 8
      %p172 = por %p170, %p171
      %p173 = scmp.ne.s32.totalorder %s162, %s163
      %p174 = scmp.eq.s32.totalorder %s32, 0
      %p175 = por %p173, %p174
      %p176 = scmp.ne.s32.totalorder %s162, %s163
      %p177 = scmp.eq.s32.totalorder %s33, 8
      %p178 = por %p176, %p177
      %p180 = scmp.ne.s32.totalorder %s163, %s179
      %p181 = scmp.eq.s32.totalorder %s33, 0
      %p182 = por %p180, %p181
      %s183 = ssub.s32 %s34, %s46
      %s184 = ssub.s32 %s35, %s42
      %s185 = sor.u32 %s183, %s184
      %p186 = scmp.eq.s32.totalorder %s185, 0
      %s188 = sadd.s32 %s187, 1
      %s189 = scalar_select %p186, %s187, %s188
      %p192 = pneg %p186
      %p193 = scmp.eq.s32.totalorder %s27, 8
      %p194 = por %p192, %p193
      %p195 = scmp.ne.s32.totalorder %s187, %s190
      %p196 = scmp.eq.s32.totalorder %s27, 0
      %p197 = por %p195, %p196
      %p198 = scmp.ne.s32.totalorder %s187, %s190
      %p199 = scmp.eq.s32.totalorder %s32, 8
      %p200 = por %p198, %p199
      %p201 = scmp.ne.s32.totalorder %s190, %s191
      %p202 = scmp.eq.s32.totalorder %s32, 0
      %p203 = por %p201, %p202
      %p204 = scmp.ne.s32.totalorder %s190, %s191
      %p205 = scmp.eq.s32.totalorder %s33, 8
      %p206 = por %p204, %p205
      %p208 = scmp.ne.s32.totalorder %s191, %s207
      %p209 = scmp.eq.s32.totalorder %s33, 0
      %p210 = por %p208, %p209
      %p211 = scmp.le.s32.totalorder 1, %s27
      %p212 = scmp.lt.s32.totalorder %s27, 10
      %p213 = pnand %p211, %p212
      %p214 = pneg %p213
      // Predicated region
      $region9: #{tpu_custom_call.1} parent=5 // pred_check
        _
      $region10: #{tpu_custom_call.1} parent=5 // pred_check_branch
        %216 = sbr.rel (%p213) target = $region12
      $region11: #{tpu_custom_call.1} parent=5 // pred_region
        %s217 = ssub.s32 %s27, 1
        // Predicated region
        $region13: #{tpu_custom_call.1} parent=11 // pred_check
          %p218 = pneg %p60
        $region14: #{tpu_custom_call.1} parent=11 // pred_check_branch
          %220 = sbr.rel (%p218) target = $region16
        $region15: #{tpu_custom_call.1} parent=11 // pred_region
          %222 = vsyncadd [#allocation8], 0
          %s223 = sshll.u32 %s2, 4
          %s224 = int_to_ptr.hbm [resolvable:$true] %s223
          %s225 = sshll.u32 [#allocation7], 4
          %s226 = int_to_ptr.vmem [resolvable:$true] %s225
          %231 = dma.hbm_to_vmem [thread:$0]  %s224, 512, %s226, [#allocation8], 128, 128, 8
        $region16: #{tpu_custom_call.1} parent=11 // pred_fallthru
          _
        // Predicated region
        $region17: #{tpu_custom_call.1} parent=11 // pred_check
          %p232 = pneg %p81
        $region18: #{tpu_custom_call.1} parent=11 // pred_check_branch
          %234 = sbr.rel (%p232) target = $region20
        $region19: #{tpu_custom_call.1} parent=11 // pred_region
          _
        $region20: #{tpu_custom_call.1} parent=11 // pred_fallthru
          _
        // Predicated region
        $region21: #{tpu_custom_call.1} parent=11 // pred_check
          %p235 = pneg %p102
        $region22: #{tpu_custom_call.1} parent=11 // pred_check_branch
          %237 = sbr.rel (%p235) target = $region24
        $region23: #{tpu_custom_call.1} parent=11 // pred_region
          _
        $region24: #{tpu_custom_call.1} parent=11 // pred_fallthru
          _
        // Predicated region
        $region25: #{tpu_custom_call.1} parent=11 // pred_check
          %p238 = pneg %p123
        $region26: #{tpu_custom_call.1} parent=11 // pred_check_branch
          %240 = sbr.rel (%p238) target = $region28
        $region27: #{tpu_custom_call.1} parent=11 // pred_region
          %242 = vsyncadd [#allocation11], 0
          %s244 = sshll.u32 %s5, 4
          %s245 = int_to_ptr.hbm [resolvable:$true] %s244
          %s246 = sshll.u32 [#allocation10], 4
          %s247 = int_to_ptr.vmem [resolvable:$true] %s246
          %249 = dma.hbm_to_vmem [thread:$0]  %s245, 16, %s247, [#allocation11]
        $region28: #{tpu_custom_call.1} parent=11 // pred_fallthru
          _
      $region12: #{tpu_custom_call.1} parent=5 // pred_fallthru
        _
      %p250 = scmp.lt.s32.totalorder %s27, 9
      // Predicated region
      $region29: #{tpu_custom_call.1} parent=5 // pred_check
        %p251 = pneg %p250
      $region30: #{tpu_custom_call.1} parent=5 // pred_check_branch
        %253 = sbr.rel (%p251) target = $region32
      $region31: #{tpu_custom_call.1} parent=5 // pred_region
        // Predicated region
        $region33: #{tpu_custom_call.1} parent=31 // pred_check
          %p254 = pneg %p143
        $region34: #{tpu_custom_call.1} parent=31 // pred_check_branch
          %256 = sbr.rel (%p254) target = $region36
        $region35: #{tpu_custom_call.1} parent=31 // pred_region
          %s257 = sand.u32 %s27, 1
          %s258 = scalar_lea.sflag [#allocation8], %s257
          %s259 = sand.u32 %s133, 1
          %s260 = smul.addr %s259, 64
          %s261 = scalar_lea.vmem [#allocation12], %s260
          %263 = vsyncadd %s258, 0
          %s264 = smul.addr %s35, 8
          %s265 = scalar_lea.hbm %s6, %s264
          %s266 = sshll.u32 %s265, 4
          %s267 = int_to_ptr.hbm [resolvable:$true] %s266
          %s268 = sshll.u32 %s261, 4
          %s269 = int_to_ptr.vmem [resolvable:$true] %s268
          %274 = dma.hbm_to_vmem [thread:$0]  %s267, 1024, %s269, %s258, 384, 128, 8
        $region36: #{tpu_custom_call.1} parent=31 // pred_fallthru
          _
        // Predicated region
        $region37: #{tpu_custom_call.1} parent=31 // pred_check
          %p275 = pneg %p169
        $region38: #{tpu_custom_call.1} parent=31 // pred_check_branch
          %277 = sbr.rel (%p275) target = $region40
        $region39: #{tpu_custom_call.1} parent=31 // pred_region
          %p278 = scmp.lt.s32.totalorder %s35, 2
          %s279 = scalar_select %p278, %s35, 2
          %s280 = scalar_lea.vmem %s7, %s279
        $region40: #{tpu_custom_call.1} parent=31 // pred_fallthru
          _
      $region32: #{tpu_custom_call.1} parent=5 // pred_fallthru
        _
      %p281 = scmp.le.s32.totalorder 1, %s27
      %p282 = scmp.lt.s32.totalorder %s27, 10
      %p283 = pnand %p281, %p282
      %p284 = pneg %p283
      // Predicated region
      $region41: #{tpu_custom_call.1} parent=5 // pred_check
        _
      $region42: #{tpu_custom_call.1} parent=5 // pred_check_branch
        %286 = sbr.rel (%p283) target = $region44
      $region43: #{tpu_custom_call.1} parent=5 // pred_region
        %s287 = ssub.s32 %s27, 1
        // Predicated region
        $region45: #{tpu_custom_call.1} parent=43 // pred_check
          %p288 = pneg %p60
        $region46: #{tpu_custom_call.1} parent=43 // pred_check_branch
          %290 = sbr.rel (%p288) target = $region48
        $region47: #{tpu_custom_call.1} parent=43 // pred_region
          %292 = dma.done [#allocation8], 512
        $region48: #{tpu_custom_call.1} parent=43 // pred_fallthru
          _
        // Predicated region
        $region49: #{tpu_custom_call.1} parent=43 // pred_check
          %p293 = pneg %p123
        $region50: #{tpu_custom_call.1} parent=43 // pred_check_branch
          %295 = sbr.rel (%p293) target = $region52
        $region51: #{tpu_custom_call.1} parent=43 // pred_region
          %297 = dma.done [#allocation11], 16
        $region52: #{tpu_custom_call.1} parent=43 // pred_fallthru
          _
        %s298 = sand.u32 %s32, 1
        %s299 = scalar_lea.sflag [#allocation8], %s298
        %s300 = sand.u32 %s136, 1
        %s301 = smul.addr %s300, 64
        %s302 = scalar_lea.vmem [#allocation12], %s301
        // Predicated region
        $region53: #{tpu_custom_call.1} parent=43 // pred_check
          %p303 = pneg %p149
        $region54: #{tpu_custom_call.1} parent=43 // pred_check_branch
          %305 = sbr.rel (%p303) target = $region56
        $region55: #{tpu_custom_call.1} parent=43 // pred_region
          %307 = dma.done %s299, 1024
        $region56: #{tpu_custom_call.1} parent=43 // pred_fallthru
          _
        %p308 = pneg %p60
        %p309 = pneg %p57
        %p310 = pneg %p81
        %p311 = pneg %p78
        %p312 = pneg %p102
        %p313 = pneg %p99
        %p314 = pneg %p123
        %p315 = pneg %p120
        %s316 = sand.u32 %s32, 1
        %s317 = scalar_lea.sflag [#allocation8], %s316
        %s318 = sand.u32 %s136, 1
        %s319 = smul.addr %s318, 64
        %s320 = scalar_lea.vmem [#allocation12], %s319
        %p321 = pneg %p149
        %p322 = pneg %p146
        %p323 = scmp.lt.s32.totalorder %s37, 2
        %s324 = scalar_select %p323, %s37, 2
        %s325 = scalar_lea.vmem %s7, %s324
        %p326 = pneg %p175
        %p327 = pneg %p172
        %p328 = pneg %p203
        %p329 = pneg %p200
        %s330 = sand.u32 %s190, 1
        %s331 = scalar_lea.sflag [#allocation9], %s330
        %s332 = sand.u32 %s190, 1
        %s333 = smul.addr %s332, 8
        %s334 = scalar_lea.vmem [#allocation13], %s333
        %p335 = scmp.lt.s32.totalorder %s37, 2
        %s336 = scalar_select %p335, %s37, 2
        %s337 = scalar_lea.vmem %s7, %s336
        %p338 = scmp.eq.s32.totalorder %s37, 0
        // Predicated region
        $region57: #{tpu_custom_call.1} parent=43 // pred_check
          %p339 = pneg %p338
        $region58: #{tpu_custom_call.1} parent=43 // pred_check_branch
          %341 = sbr.rel (%p339) target = $region60
        $region59: #{tpu_custom_call.1} parent=43 // pred_region
          loop: start=0, step=1, limit=8
          $region61: #{tpu_custom_call.1} parent=59 // loop_pre_header
            _
          $region62: #{tpu_custom_call.1} parent=59 // loop_header
            %s343 = sphi 0, %s347
            %p344 = scmp.ge.s32.totalorder %s343, 8
          $region63: #{tpu_custom_call.1} parent=59 // loop_header_branch
            %346 = sbr.rel (%p344) target = $region67
          $region64: #{tpu_custom_call.1} parent=59 // loop_body
            %p348 = scmp.ge.s32.totalorder %s343, 8
            // Predicated region
            $region68: #{tpu_custom_call.1} parent=64 // pred_check
              %p349 = pneg %p348
            $region69: #{tpu_custom_call.1} parent=64 // pred_check_branch
              %351 = sbr.rel (%p349) target = $region71
            $region70: #{tpu_custom_call.1} parent=64 // pred_region
              %s352 = sand.u32 %s343, 7
              %s353 = scalar_lea.sflag [#allocation4], %s352
              %s354 = smul.u32 1, 1
              %s355 = sshll.u32 %s354, 4
              %356 = dma.done %s353, %s355
            $region71: #{tpu_custom_call.1} parent=64 // pred_fallthru
              _
            %s357 = smul.u32 %s36, 8
            %s358 = sadd.s32 %s357, %s343
            %s359 = sld [smem:[#allocation6 + %s358]]
            %s360 = sand.u32 %s343, 7
            %s361 = scalar_lea.hbm %s1, %s359
            %s362 = scalar_lea.vmem [#allocation2], %s343
            %s363 = scalar_lea.sflag [#allocation4], %s360
            // Predicated region
            $region72: #{tpu_custom_call.1} parent=64 // pred_check
              _
            $region73: #{tpu_custom_call.1} parent=64 // pred_check_branch
              %365 = sbr.rel target = $region75
            $region74: #{tpu_custom_call.1} parent=64 // pred_region
              %366 = sst [smem:[#allocation16]] [#allocation15]
              %367 = sst [smem:[#allocation17]] [#allocation14]
            $region75: #{tpu_custom_call.1} parent=64 // pred_fallthru
              _
            %369 = shalt.err (0)
            %s371 = sshll.u32 %s361, 4
            %s372 = int_to_ptr.hbm [resolvable:$true] %s371
            %s373 = sshll.u32 %s362, 4
            %s374 = int_to_ptr.vmem [resolvable:$true] %s373
            %376 = dma.hbm_to_vmem [thread:$0]  %s372, 16, %s374, %s363
          $region65: #{tpu_custom_call.1} parent=59 // loop_footer
            %s347 = sadd.s32 1, %s343
          $region66: #{tpu_custom_call.1} parent=59 // loop_footer_branch
            %342 = sbr.rel target = $region62
          $region67: #{tpu_custom_call.1} parent=59 // loop_exit
            _
          loop: start=0, step=1, limit=8
          $region76: #{tpu_custom_call.1} parent=59 // loop_pre_header
            _
          $region77: #{tpu_custom_call.1} parent=59 // loop_header
            %s378 = sphi 0, %s382
            %p379 = scmp.ge.s32.totalorder %s378, 8
          $region78: #{tpu_custom_call.1} parent=59 // loop_header_branch
            %381 = sbr.rel (%p379) target = $region82
          $region79: #{tpu_custom_call.1} parent=59 // loop_body
            %s383 = sand.u32 %s378, 7
            %s384 = scalar_lea.sflag [#allocation4], %s383
            %s385 = smul.u32 1, 1
            %s386 = sshll.u32 %s385, 4
            %387 = dma.done %s384, %s386
          $region80: #{tpu_custom_call.1} parent=59 // loop_footer
            %s382 = sadd.s32 1, %s378
          $region81: #{tpu_custom_call.1} parent=59 // loop_footer_branch
            %377 = sbr.rel target = $region77
          $region82: #{tpu_custom_call.1} parent=59 // loop_exit
            _
          %v388 = vld [vmem:[#allocation2] sm:$0xff]
          %v389 = vld [vmem:[#allocation7] sm:$0xff]
          %v390 = vld [vmem:[#allocation7 + $0x8] sm:$0xff]
          %v391 = vld [vmem:[#allocation7 + $0x10] sm:$0xff]
          %v392 = vld [vmem:[#allocation7 + $0x18] sm:$0xff]
          %v393 = vld [vmem:[%s3] sm:$0x1]
          %v395 = vperm.slane %v393, 0
          %vm397 = vcmask 261120
          %v399 = vsel %vm397, %v388, 0
          %401 = vmatpush.msra.mxu0 0.0
          %402 = vmatpush.msra.mxu0 0.0
          %403 = vmatpush.msra.mxu0 0.0
          %404 = vmatpush.msra.mxu0 0.0
          %405 = vmatpush.msra.mxu0 0.0
          %406 = vmatpush.msra.mxu0 0.0
          %407 = vmatpush.msra.mxu0 0.0
          %408 = vmatpush.msra.mxu0 0.0
          %409 = vmatpush.msra.mxu0 0.0
          %410 = vmatpush.msra.mxu0 0.0
          %411 = vmatpush.msra.mxu0 0.0
          %412 = vmatpush.msra.mxu0 0.0
          %413 = vmatpush.msra.mxu0 %v392
          %414 = vmatpush.msra.mxu0 %v391
          %415 = vmatpush.msra.mxu0 %v390
          %416 = vmatpush.msra.mxu0 %v389
          %417 = vmatmul.f32.gmra.mxu0 %v399
          %v418 = vpop.f32.mrf.mxu0
          %v419 = vadd.f32 %v395, %v418
          %420 = vdwg.mxu0
          %v421 = vmax.f32 %v419, 0.0
          %vm422 = vcmask 523264
          %v423 = vsel %vm422, %v421, 0.0
          %424 = vadd.xlane.f32.xlu0 %v423
          %v425 = vpop.xlane.xlu0 %424
          %v426 = vrcp.pop 64.0
          %v427 = vmul.f32 64.0, %v426
          %v428 = vsub.f32 1.0, %v427
          %v429 = vmul.f32 %v426, %v428
          %v430 = vadd.f32 %v426, %v429
          %vm431 = vweird.f32 %v426
          %v432 = vsel %vm431, %v426, %v430
          %v433 = vmul.f32 %v425, %v432
          %v434 = vsub.f32 %v421, %v433
          %v435 = vmul.f32 %v434, %v434
          %v436 = vsel %vm422, %v435, 0.0
          %437 = vadd.xlane.f32.xlu0 %v436
          %v438 = vpop.xlane.xlu0 %437
          %v439 = vmul.f32 %v438, %v432
          %v440 = vadd.f32 %v439, 1e-05
          %v441 = vrsqrt.pop %v440
          %v442 = vmul.f32 %v441, %v440
          %v443 = vmul.f32 %v442, %v441
          %v444 = vmul.f32 0.5, %v443
          %v445 = vsub.f32 1.5, %v444
          %v446 = vmul.f32 %v441, %v445
          %vm447 = vweird.f32 %v440
          %vm448 = vweird.f32 %v441
          %vm449 = vmor %vm447, %vm448
          %v450 = vsel %vm449, %v441, %v446
          %v451 = vmul.f32 %v434, %v450
          %v452 = vld [vmem:[%s4] sm:$0x1]
          %v454 = vperm.slane %v452, 0
          %v456 = vmul.f32 %v451, %v454
          %v457 = vld [vmem:[#allocation10] sm:$0x1]
          %v459 = vperm.slane %v457, 0
          %v461 = vadd.f32 %v456, %v459
          %462 = vst.msk [vmem:[#allocation3] sm:$0xff] %vm422, %v461
        $region60: #{tpu_custom_call.1} parent=43 // pred_fallthru
          _
        %v463 = vld [vmem:[#allocation3] sm:$0xff]
        %v464 = vld [vmem:[%s302] sm:$0xff]
        %v465 = vld [vmem:[%s302 + $0x8] sm:$0xff]
        %v466 = vld [vmem:[%s302 + $0x10] sm:$0xff]
        %v467 = vld [vmem:[%s302 + $0x18] sm:$0xff]
        %v468 = vld [vmem:[%s302 + $0x20] sm:$0xff]
        %v469 = vld [vmem:[%s302 + $0x28] sm:$0xff]
        %v470 = vld [vmem:[%s302 + $0x30] sm:$0xff]
        %v471 = vld [vmem:[%s302 + $0x38] sm:$0xff]
        %v472 = vld [vmem:[%s337] sm:$0x1]
        %v474 = vperm.slane %v472, 0
        %vm476 = vcmask 523264
        %v478 = vsel %vm476, %v463, 0
        %480 = vmatpush.msra.mxu0 0.0
        %481 = vmatpush.msra.mxu0 0.0
        %482 = vmatpush.msra.mxu0 0.0
        %483 = vmatpush.msra.mxu0 0.0
        %484 = vmatpush.msra.mxu0 0.0
        %485 = vmatpush.msra.mxu0 0.0
        %486 = vmatpush.msra.mxu0 0.0
        %487 = vmatpush.msra.mxu0 0.0
        %488 = vmatpush.msra.mxu0 %v471
        %489 = vmatpush.msra.mxu0 %v470
        %490 = vmatpush.msra.mxu0 %v469
        %491 = vmatpush.msra.mxu0 %v468
        %492 = vmatpush.msra.mxu0 %v467
        %493 = vmatpush.msra.mxu0 %v466
        %494 = vmatpush.msra.mxu0 %v465
        %495 = vmatpush.msra.mxu0 %v464
        %496 = vmatmul.f32.gmra.mxu0 %v478
        %v497 = vpop.f32.mrf.mxu0
        %v498 = vadd.f32 %v474, %v497
        %499 = vdwg.mxu0
        %500 = vst [vmem:[%s334] sm:$0xff] %v498
        %s501 = sand.u32 %s190, 1
        %s502 = scalar_lea.sflag [#allocation9], %s501
        %s503 = sand.u32 %s190, 1
        %s504 = smul.addr %s503, 8
        %s505 = scalar_lea.vmem [#allocation13], %s504
        // Predicated region
        $region83: #{tpu_custom_call.1} parent=43 // pred_check
          %p506 = pneg %p200
        $region84: #{tpu_custom_call.1} parent=43 // pred_check_branch
          %508 = sbr.rel (%p506) target = $region86
        $region85: #{tpu_custom_call.1} parent=43 // pred_region
          %510 = vsyncadd %s502, 0
          %s511 = smul.addr %s36, 3
          %s512 = sadd.s32 %s37, %s511
          %s513 = smul.addr %s512, 8
          %s514 = scalar_lea.hbm %s8, %s513
          %s516 = sshll.u32 %s505, 4
          %s517 = int_to_ptr.vmem [resolvable:$true] %s516
          %s518 = sshll.u32 %s514, 4
          %s519 = int_to_ptr.hbm [resolvable:$true] %s518
          %521 = dma.vmem_to_hbm [thread:$0]  %s517, 128, %s519, %s502
        $region86: #{tpu_custom_call.1} parent=43 // pred_fallthru
          _
      $region44: #{tpu_custom_call.1} parent=5 // pred_fallthru
        _
      %p522 = scmp.le.s32.totalorder 2, %s27
      // Predicated region
      $region87: #{tpu_custom_call.1} parent=5 // pred_check
        %p523 = pneg %p522
      $region88: #{tpu_custom_call.1} parent=5 // pred_check_branch
        %525 = sbr.rel (%p523) target = $region90
      $region89: #{tpu_custom_call.1} parent=5 // pred_region
        %s526 = ssub.s32 %s27, 2
        // Predicated region
        $region91: #{tpu_custom_call.1} parent=89 // pred_check
          %p527 = pneg %p206
        $region92: #{tpu_custom_call.1} parent=89 // pred_check_branch
          %529 = sbr.rel (%p527) target = $region94
        $region93: #{tpu_custom_call.1} parent=89 // pred_region
          %s530 = sand.u32 %s191, 1
          %s531 = scalar_lea.sflag [#allocation9], %s530
          %s532 = sand.u32 %s191, 1
          %s533 = smul.addr %s532, 8
          %s534 = scalar_lea.vmem [#allocation13], %s533
          %536 = dma.done %s531, 128
        $region94: #{tpu_custom_call.1} parent=89 // pred_fallthru
          _
      $region90: #{tpu_custom_call.1} parent=5 // pred_fallthru
        _
    $region6: #{tpu_custom_call.1} parent=1 // loop_footer
      %s31 = sadd.s32 1, %s27
    $region7: #{tpu_custom_call.1} parent=1 // loop_footer_branch
      %26 = sbr.rel target = $region3
    $region8: #{tpu_custom_call.1} parent=1 // loop_exit
      _
    %537 = vsyncpa [#allocation8], 1
    %s538 = scalar_lea.sflag [#allocation8], 1
    %539 = vsyncpa %s538, 1
    %540 = vsyncpa [#allocation11], 1
    %541 = vsyncpa [#allocation9], 1
    %s542 = scalar_lea.sflag [#allocation9], 1
    %543 = vsyncpa %s542, 1
  %544 = vsyncmov [#allocation4]
  %s545 = vpop.sfrf %544
  %p546 = scmp.eq.s32.totalorder %s545, 0
  %p547 = pneg %p546
  %549 = shalt.err (%p547)
  %s550 = scalar_lea.sflag [#allocation4], 1
  %551 = vsyncmov %s550
  %s552 = vpop.sfrf %551
  %p553 = scmp.eq.s32.totalorder %s552, 0
  %p554 = pneg %p553
  %556 = shalt.err (%p554)
  %s557 = scalar_lea.sflag [#allocation4], 2
  %558 = vsyncmov %s557
  %s559 = vpop.sfrf %558
  %p560 = scmp.eq.s32.totalorder %s559, 0
  %p561 = pneg %p560
  %563 = shalt.err (%p561)
  %s564 = scalar_lea.sflag [#allocation4], 3
  %565 = vsyncmov %s564
  %s566 = vpop.sfrf %565
  %p567 = scmp.eq.s32.totalorder %s566, 0
  %p568 = pneg %p567
  %570 = shalt.err (%p568)
  %s571 = scalar_lea.sflag [#allocation4], 4
  %572 = vsyncmov %s571
  %s573 = vpop.sfrf %572
  %p574 = scmp.eq.s32.totalorder %s573, 0
  %p575 = pneg %p574
  %577 = shalt.err (%p575)
  %s578 = scalar_lea.sflag [#allocation4], 5
  %579 = vsyncmov %s578
  %s580 = vpop.sfrf %579
  %p581 = scmp.eq.s32.totalorder %s580, 0
  %p582 = pneg %p581
  %584 = shalt.err (%p582)
  %s585 = scalar_lea.sflag [#allocation4], 6
  %586 = vsyncmov %s585
  %s587 = vpop.sfrf %586
  %p588 = scmp.eq.s32.totalorder %s587, 0
  %p589 = pneg %p588
  %591 = shalt.err (%p589)
  %s592 = scalar_lea.sflag [#allocation4], 7
  %593 = vsyncmov %s592
  %s594 = vpop.sfrf %593
  %p595 = scmp.eq.s32.totalorder %s594, 0
  %p596 = pneg %p595
  %598 = shalt.err (%p596)

</llo_original>
